<compile_context>
chip_gen: v7x
topology: tpu7x:2x2x1
jax: 0.10.0
libtpu: 0.0.40
codegen_flags: <defaults>
</compile_context>

<pallas_src>
import jax
import jax.numpy as jnp
from jax.experimental import pallas as pl
from jax.experimental.pallas import tpu as pltpu


# ----------------------------------------------------------------------------
# Kernel
# ----------------------------------------------------------------------------
def _attention_kernel(prof_ref, intr_ref, w1p_ref, w1i_ref, b1_ref,
                      w2_ref, b2_ref, out_ref):
    # Compute in f32 regardless of I/O dtype.
    prof = prof_ref[...].astype(jnp.float32)                 # (blk, lane)
    intr = intr_ref[...].astype(jnp.float32)                 # (blk, lane)

    # Layer 1: Linear(2*emb -> h1) per original row, expressed as two
    # block-diagonal matmuls (profile half + interests half) + bias, ReLU.
    h = jnp.dot(prof, w1p_ref[...], preferred_element_type=jnp.float32)
    h = h + jnp.dot(intr, w1i_ref[...], preferred_element_type=jnp.float32)
    h = jnp.maximum(h + b1_ref[...], 0.0)                    # (blk, pack*h1)

    # Layer 2: Linear(h1 -> 3) + Sigmoid against zero-padded block-diagonal
    # weights.  Padded lanes carry a -1e30 bias so sigmoid -> exactly 0,
    # reproducing F.pad without any in-kernel mask.
    logits = jnp.dot(h, w2_ref[...], preferred_element_type=jnp.float32)
    a = jax.nn.sigmoid(logits + b2_ref[...])                 # (blk, lane)

    out_ref[...] = (prof * a).astype(out_ref.dtype)


# ----------------------------------------------------------------------------
# Wrapper-side helpers (tiny, trace-time only)
# ----------------------------------------------------------------------------
def _choose_pack(rows, emb, h1, max_lane=1024):
    """Packing factor: must divide `rows` (so no wrapper pad copies).

    Preference order: (pack*emb and pack*h1 both 128-lane dense) >
    (pack*emb 128-lane dense) > pack=1; smallest such pack wins (keeps the
    block-diagonal weights small)."""
    best_score, best_p = (False, False, 0), 1
    for p in range(1, max(1, min(rows, max_lane // emb)) + 1):
        if rows % p:
            continue
        lane_ok = (p * emb) % 128 == 0
        hid_ok = lane_ok and (p * h1) % 128 == 0
        score = (hid_ok, lane_ok, -p)
        if score > best_score:
            best_score, best_p = score, p
    return best_p


def _tile_rows(rows_pk, lane, itemsize=4):
    """Pick the packed-row block size.

    Step count first: even and >=4 when blocks stay >=~1 MiB (v7x megacore +
    pipelining), blocks capped at ~4 MiB per streaming buffer (double-buffered
    working set ~24 MiB, well under the explicit 48 MiB VMEM limit)."""
    sub = 8
    per_row = lane * itemsize
    min_blk = max(sub, ((1 << 20) // per_row) // sub * sub)      # ~1 MiB/block
    blk_cap = max(min_blk, ((4 << 20) // per_row) // sub * sub)  # ~4 MiB/block
    steps_needed = pl.cdiv(rows_pk, blk_cap)                     # VMEM hard bound
    steps_useful = max(1, rows_pk // min_blk)                    # avoid tiny blocks
    n_steps = max(min(max(steps_needed, 4), steps_useful), steps_needed)
    if n_steps > 1 and n_steps % 2:
        n_steps += 1                                             # even split over 2 TCs
    blk = min(blk_cap, -(-pl.cdiv(rows_pk, n_steps) // sub) * sub)
    if blk >= rows_pk:
        blk = rows_pk                                            # single full-extent block
    return blk


# ----------------------------------------------------------------------------
# Public entry point
# ----------------------------------------------------------------------------
def user_profile_interest_attention(user_interests, user_profile, params):
    """user_interests, user_profile: (bs, N, emb) float arrays."""
    bs, num_interest, emb = user_interests.shape
    w1, b1, w2, b2 = params              # torch layout: w1 (h1, 2*emb), w2 (u, h1)
    h1 = w1.shape[0]
    n_units = w2.shape[0]
    out_dtype = user_profile.dtype

    rows = bs * num_interest
    pack = _choose_pack(rows, emb, h1)
    lane = pack * emb
    rows_pk = rows // pack               # exact: pack divides rows

    # --- block-diagonal f32 weights (tiny; stay resident in VMEM).
    eye = jnp.eye(pack, dtype=jnp.float32)
    w1_t = jnp.asarray(w1, jnp.float32).T                      # (2*emb, h1)
    w1p_blk = jnp.kron(eye, w1_t[:emb, :])                     # (lane, pack*h1)
    w1i_blk = jnp.kron(eye, w1_t[emb:, :])                     # (lane, pack*h1)
    w2_pad = jnp.zeros((h1, emb), jnp.float32).at[:, :n_units].set(
        jnp.asarray(w2, jnp.float32).T)
    w2_blk = jnp.kron(eye, w2_pad)                             # (pack*h1, lane)
    b1_blk = jnp.tile(jnp.asarray(b1, jnp.float32), pack).reshape(1, pack * h1)
    b2_pad = jnp.full((emb,), -1e30, jnp.float32).at[:n_units].set(
        jnp.asarray(b2, jnp.float32))
    b2_blk = jnp.tile(b2_pad, pack).reshape(1, lane)

    # --- lane-packed views: free contiguous reshapes, NO pads / copies.
    prof_pk = user_profile.reshape(rows_pk, lane)
    intr_pk = user_interests.reshape(rows_pk, lane)

    blk = _tile_rows(rows_pk, lane)
    grid = (pl.cdiv(rows_pk, blk),)      # partial last block clipped by Pallas
    row_map = lambda i: (i, 0)
    full = lambda i: (0, 0)

    bytes_accessed = (rows * emb * (user_profile.dtype.itemsize
                                    + user_interests.dtype.itemsize
                                    + jnp.dtype(out_dtype).itemsize))
    cost = pl.CostEstimate(
        flops=6 * rows_pk * lane * pack * h1 + 4 * rows_pk * lane,
        transcendentals=rows_pk * lane,
        bytes_accessed=bytes_accessed,
    )

    out_pk = pl.pallas_call(
        _attention_kernel,
        out_shape=jax.ShapeDtypeStruct((rows_pk, lane), out_dtype),
        grid=grid,
        in_specs=[
            pl.BlockSpec((blk, lane), row_map),                # packed profile
            pl.BlockSpec((blk, lane), row_map),                # packed interests
            pl.BlockSpec((lane, pack * h1), full),             # W1 profile half
            pl.BlockSpec((lane, pack * h1), full),             # W1 interests half
            pl.BlockSpec((1, pack * h1), full),                # b1 (tiled)
            pl.BlockSpec((pack * h1, lane), full),             # W2 (padded, blk-diag)
            pl.BlockSpec((1, lane), full),                     # b2 (-1e30 padded)
        ],
        out_specs=pl.BlockSpec((blk, lane), row_map),
        compiler_params=pltpu.CompilerParams(
            dimension_semantics=("parallel",),
            vmem_limit_bytes=48 * 1024 * 1024,
        ),
        cost_estimate=cost,
    )(prof_pk, intr_pk, w1p_blk, w1i_blk, b1_blk, w2_blk, b2_blk)

    # Free reshape back — no slice needed (rows_pk * pack == rows exactly).
    return out_pk.reshape(bs, num_interest, emb)


# ----------------------------------------------------------------------------
# Pure-JAX reference + deterministic init (for validation only)
# ----------------------------------------------------------------------------
def _reference(user_interests, user_profile, params):
    """Matches the PyTorch forward in eval mode (dropout = identity)."""
    w1, b1, w2, b2 = params
    emb = user_profile.shape[-1]
    x = jnp.concatenate([user_profile, user_interests], axis=-1)
    x = jnp.maximum(x @ w1.T + b1, 0.0)
    x = jax.nn.sigmoid(x @ w2.T + b2)
    x = jnp.pad(x, ((0, 0), (0, 0), (0, emb - x.shape[-1])))
    return user_profile * x


def _init_params(key, emb, units=(8, 3)):
    """nn.Linear-style init (uniform +-1/sqrt(fan_in))."""
    k1, k2, k3, k4 = jax.random.split(key, 4)
    in1 = 2 * emb
    lim1 = 1.0 / jnp.sqrt(in1)
    lim2 = 1.0 / jnp.sqrt(units[0])
    w1 = jax.random.uniform(k1, (units[0], in1), jnp.float32, -lim1, lim1)
    b1 = jax.random.uniform(k2, (units[0],), jnp.float32, -lim1, lim1)
    w2 = jax.random.uniform(k3, (units[1], units[0]), jnp.float32, -lim2, lim2)
    b2 = jax.random.uniform(k4, (units[1],), jnp.float32, -lim2, lim2)
    return w1, b1, w2, b2


if __name__ == "__main__":
    # NOTE: dropout(p=0.3) is identity in eval/inference mode; not emitted.
    bs, num_interest, emb = 2, 8, 32
    key = jax.random.PRNGKey(0)
    k_i, k_p, k_w, k_i2, k_p2 = jax.random.split(key, 5)
    user_interests = jax.random.normal(k_i, (bs, num_interest, emb), jnp.float32)
    user_profile = jax.random.normal(k_p, (bs, num_interest, emb), jnp.float32)
    params = _init_params(k_w, emb)

    out = user_profile_interest_attention(user_interests, user_profile, params)
    out = jax.block_until_ready(out)
    ref = _reference(user_interests, user_profile, params)
    assert out.shape == (bs, num_interest, emb)
    assert jnp.allclose(out, ref, atol=1e-5, rtol=1e-5), "mismatch vs reference"

    # Extra validation: multi-step grid with a non-divisible (partial) last
    # block -- exercises the no-pad / Pallas-clipped path (still small & fast).
    bs2, n2 = 16, 1025
    ui2 = jax.random.normal(k_i2, (bs2, n2, emb), jnp.float32)
    up2 = jax.random.normal(k_p2, (bs2, n2, emb), jnp.float32)
    out2 = jax.block_until_ready(
        user_profile_interest_attention(ui2, up2, params))
    ref2 = _reference(ui2, up2, params)
    assert jnp.allclose(out2, ref2, atol=1e-5, rtol=1e-5), "mismatch (big case)"

    print("KERNEL_OK")
</pallas_src>

<mosaic_0001>
module attributes {stable_mosaic.version = 11 : i64} {
  func.func @_attention_kernel(%arg0: i32, %arg1: memref<1x512xf32, #tpu.memory_space<vmem>>, %arg2: memref<1x512xf32, #tpu.memory_space<vmem>>, %arg3: memref<512x128xf32, #tpu.memory_space<vmem>>, %arg4: memref<512x128xf32, #tpu.memory_space<vmem>>, %arg5: memref<1x128xf32, #tpu.memory_space<vmem>>, %arg6: memref<128x512xf32, #tpu.memory_space<vmem>>, %arg7: memref<1x512xf32, #tpu.memory_space<vmem>>, %arg8: memref<1x512xf32, #tpu.memory_space<vmem>>) attributes {dimension_semantics = [#tpu.dimension_semantics<parallel>], iteration_bounds = array<i64: 1>, scalar_prefetch = 0 : i64, scratch_operands = 0 : i64, tpu.core_type = #tpu.core_type<tc>, window_params = [{transform_indices = @transform_0, window_bounds = array<i64: 1, 512>}, {transform_indices = @transform_1, window_bounds = array<i64: 1, 512>}, {pipeline_mode = #tpu.pipeline_mode<synchronous>, transform_indices = @transform_2, window_bounds = array<i64: 512, 128>}, {pipeline_mode = #tpu.pipeline_mode<synchronous>, transform_indices = @transform_3, window_bounds = array<i64: 512, 128>}, {pipeline_mode = #tpu.pipeline_mode<synchronous>, transform_indices = @transform_4, window_bounds = array<i64: 1, 128>}, {pipeline_mode = #tpu.pipeline_mode<synchronous>, transform_indices = @transform_5, window_bounds = array<i64: 128, 512>}, {pipeline_mode = #tpu.pipeline_mode<synchronous>, transform_indices = @transform_6, window_bounds = array<i64: 1, 512>}, {transform_indices = @transform_7, window_bounds = array<i64: 1, 512>}]} {
    %c0 = arith.constant 0 : index
    %c0_0 = arith.constant 0 : index
    %0 = vector.load %arg1[%c0, %c0_0] : memref<1x512xf32, #tpu.memory_space<vmem>>, vector<1x512xf32>
    %c0_1 = arith.constant 0 : index
    %c0_2 = arith.constant 0 : index
    %1 = vector.load %arg2[%c0_1, %c0_2] : memref<1x512xf32, #tpu.memory_space<vmem>>, vector<1x512xf32>
    %c0_3 = arith.constant 0 : index
    %c0_4 = arith.constant 0 : index
    %2 = vector.load %arg3[%c0_3, %c0_4] : memref<512x128xf32, #tpu.memory_space<vmem>>, vector<512x128xf32>
    %cst = arith.constant dense<0.000000e+00> : vector<1x128xf32>
    %3 = tpu.matmul %0, %2, %cst {dimension_numbers = #tpu.dot_dimension_numbers<[1], [0], [0], [1], [0, 0, 1, 1], [], []>} : vector<1x512xf32>, vector<512x128xf32>, vector<1x128xf32> -> vector<1x128xf32>
    %c0_5 = arith.constant 0 : index
    %c0_6 = arith.constant 0 : index
    %4 = vector.load %arg4[%c0_5, %c0_6] : memref<512x128xf32, #tpu.memory_space<vmem>>, vector<512x128xf32>
    %cst_7 = arith.constant dense<0.000000e+00> : vector<1x128xf32>
    %5 = tpu.matmul %1, %4, %cst_7 {dimension_numbers = #tpu.dot_dimension_numbers<[1], [0], [0], [1], [0, 0, 1, 1], [], []>} : vector<1x512xf32>, vector<512x128xf32>, vector<1x128xf32> -> vector<1x128xf32>
    %6 = arith.addf %3, %5 : vector<1x128xf32>
    %c0_8 = arith.constant 0 : index
    %c0_9 = arith.constant 0 : index
    %7 = vector.load %arg5[%c0_8, %c0_9] : memref<1x128xf32, #tpu.memory_space<vmem>>, vector<1x128xf32>
    %8 = arith.addf %6, %7 : vector<1x128xf32>
    %cst_10 = arith.constant 0.000000e+00 : f32
    %9 = vector.broadcast %cst_10 : f32 to vector<1x128xf32>
    %10 = arith.maximumf %8, %9 : vector<1x128xf32>
    %c0_11 = arith.constant 0 : index
    %c0_12 = arith.constant 0 : index
    %11 = vector.load %arg6[%c0_11, %c0_12] : memref<128x512xf32, #tpu.memory_space<vmem>>, vector<128x512xf32>
    %cst_13 = arith.constant dense<0.000000e+00> : vector<1x512xf32>
    %12 = tpu.matmul %10, %11, %cst_13 {dimension_numbers = #tpu.dot_dimension_numbers<[1], [0], [0], [1], [0, 0, 1, 1], [], []>} : vector<1x128xf32>, vector<128x512xf32>, vector<1x512xf32> -> vector<1x512xf32>
    %c0_14 = arith.constant 0 : index
    %c0_15 = arith.constant 0 : index
    %13 = vector.load %arg7[%c0_14, %c0_15] : memref<1x512xf32, #tpu.memory_space<vmem>>, vector<1x512xf32>
    %14 = arith.addf %12, %13 : vector<1x512xf32>
    %15 = arith.negf %14 : vector<1x512xf32>
    %16 = math.exp %15 : vector<1x512xf32>
    %cst_16 = arith.constant 1.000000e+00 : f32
    %17 = vector.broadcast %cst_16 : f32 to vector<1x512xf32>
    %18 = arith.addf %17, %16 : vector<1x512xf32>
    %19 = arith.divf %17, %18 : vector<1x512xf32>
    %20 = arith.mulf %0, %19 : vector<1x512xf32>
    %c0_17 = arith.constant 0 : index
    %c0_18 = arith.constant 0 : index
    %21 = vector.load %arg8[%c0_17, %c0_18] : memref<1x512xf32, #tpu.memory_space<vmem>>, vector<1x512xf32>
    tpu.vector_store %arg8[%c0_17, %c0_18], %20 {strides = array<i32>} : memref<1x512xf32, #tpu.memory_space<vmem>>, vector<1x512xf32>,
    return
  }
  func.func @transform_0(%arg0: i32) -> (i32, i32) {
    %c0_i32 = arith.constant 0 : i32
    %c0_i32_0 = arith.constant 0 : i32
    return %arg0, %c0_i32 : i32, i32
  }
  func.func @transform_1(%arg0: i32) -> (i32, i32) {
    %c0_i32 = arith.constant 0 : i32
    %c0_i32_0 = arith.constant 0 : i32
    return %arg0, %c0_i32 : i32, i32
  }
  func.func @transform_2(%arg0: i32) -> (i32, i32) {
    %c0_i32 = arith.constant 0 : i32
    %c0_i32_0 = arith.constant 0 : i32
    %c0_i32_1 = arith.constant 0 : i32
    return %c0_i32, %c0_i32_0 : i32, i32
  }
  func.func @transform_3(%arg0: i32) -> (i32, i32) {
    %c0_i32 = arith.constant 0 : i32
    %c0_i32_0 = arith.constant 0 : i32
    %c0_i32_1 = arith.constant 0 : i32
    return %c0_i32, %c0_i32_0 : i32, i32
  }
  func.func @transform_4(%arg0: i32) -> (i32, i32) {
    %c0_i32 = arith.constant 0 : i32
    %c0_i32_0 = arith.constant 0 : i32
    %c0_i32_1 = arith.constant 0 : i32
    return %c0_i32, %c0_i32_0 : i32, i32
  }
  func.func @transform_5(%arg0: i32) -> (i32, i32) {
    %c0_i32 = arith.constant 0 : i32
    %c0_i32_0 = arith.constant 0 : i32
    %c0_i32_1 = arith.constant 0 : i32
    return %c0_i32, %c0_i32_0 : i32, i32
  }
  func.func @transform_6(%arg0: i32) -> (i32, i32) {
    %c0_i32 = arith.constant 0 : i32
    %c0_i32_0 = arith.constant 0 : i32
    %c0_i32_1 = arith.constant 0 : i32
    return %c0_i32, %c0_i32_0 : i32, i32
  }
  func.func @transform_7(%arg0: i32) -> (i32, i32) {
    %c0_i32 = arith.constant 0 : i32
    %c0_i32_0 = arith.constant 0 : i32
    return %arg0, %c0_i32 : i32, i32
  }
}

</mosaic_0001>

<llo_original>
// kernel: tpu_custom_call.1
$region0: #{tpu_custom_call.1}
  #allocation0 [shape = 'u32[]', space=smem, size = 0x4, offset = 0x4, fixed_abs, tag = 'smem constant byte address 0x4 - core index']
  #allocation1 [shape = 'u32[144,128]{1,0:T(1,128)}', space=vmem, size = 0x12000, scoped, tag = 'internal scratch']
  %s0 = inlined_call_operand.hbm [shape: f32[1,512], index: 0, kind: input, shape index: {}]
  %s1 = inlined_call_operand.hbm [shape: f32[1,512], index: 1, kind: input, shape index: {}]
  %s2 = inlined_call_operand.hbm [shape: f32[512,128], index: 2, kind: input, shape index: {}]
  %s3 = inlined_call_operand.hbm [shape: f32[512,128], index: 3, kind: input, shape index: {}]
  %s4 = inlined_call_operand.vmem [shape: f32[1,128], index: 4, kind: input, shape index: {}]
  %s5 = inlined_call_operand.hbm [shape: f32[128,512], index: 5, kind: input, shape index: {}]
  %s6 = inlined_call_operand.vmem [shape: f32[1,512], index: 6, kind: input, shape index: {}]
  %s7 = inlined_call_operand.hbm [shape: f32[1,512], index: 7, kind: output, shape index: {}]
  %s8 = sld [smem:[#allocation0]]
  $region58: #{tpu_custom_call.1} parent=0
    _
  %s10 = ssub.s32 1, %s8
  %s11 = scalar_select 0, %s10, %s8
  $region1: #{tpu_custom_call.1} parent=0
    #allocation2 [shape = 'u8[2048]{0}', space=vmem, size = 0x800, scoped, tag = 'input window, operand 0, single buffered']
    #allocation3 [shape = 's32[1]{0}', space=sflag, size = 0x4, scoped, tag = 'scoped memory for tpu_custom_call.1']
    #allocation4 [shape = 's32[1]{0}', space=sflag, size = 0x4, scoped, tag = 'scoped memory for tpu_custom_call.1']
    #allocation5 [shape = 'u8[2048]{0}', space=vmem, size = 0x800, scoped, tag = 'input window, operand 1, single buffered']
    #allocation6 [shape = 's32[1]{0}', space=sflag, size = 0x4, scoped, tag = 'scoped memory for tpu_custom_call.1']
    #allocation7 [shape = 'u8[262144]{0}', space=vmem, size = 0x40000, scoped, tag = 'input window, operand 2, single buffered']
    #allocation8 [shape = 'u8[262144]{0}', space=vmem, size = 0x40000, scoped, tag = 'input window, operand 3, single buffered']
    #allocation9 [shape = 's32[1]{0}', space=sflag, size = 0x4, scoped, tag = 'scoped memory for tpu_custom_call.1']
    #allocation10 [shape = 'u8[262144]{0}', space=vmem, size = 0x40000, scoped, tag = 'input window, operand 5, single buffered']
    #allocation11 [shape = 'u8[2048]{0}', space=vmem, size = 0x800, scoped, tag = 'output window, operand 0, single buffered']
    %12 = vsyncpa [#allocation3], 0
    %13 = vsyncpa [#allocation6], 0
    %14 = vsyncpa [#allocation9], 0
    %15 = vsyncpa [#allocation4], 0
    // Predicated region
    $region2: #{tpu_custom_call.1} parent=1 // pred_check
      _
    $region3: #{tpu_custom_call.1} parent=1 // pred_check_branch
      %17 = sbr.rel (0) target = $region5
    $region4: #{tpu_custom_call.1} parent=1 // pred_region
      %s19 = ssub.s32 64, 64
      %20 = vsyncadd [#allocation3], %s19
      %s22 = sshll.u32 [#allocation2], 4
      %s23 = int_to_ptr.vmem [resolvable:$true] %s22
      %25 = dma.hbm_to_vmem [thread:$0]  %s0, 64, %s23, [#allocation3]
    $region5: #{tpu_custom_call.1} parent=1 // pred_fallthru
      _
    // Predicated region
    $region6: #{tpu_custom_call.1} parent=1 // pred_check
      _
    $region7: #{tpu_custom_call.1} parent=1 // pred_check_branch
      %27 = sbr.rel (0) target = $region9
    $region8: #{tpu_custom_call.1} parent=1 // pred_region
      %s29 = ssub.s32 64, 64
      %30 = vsyncadd [#allocation6], %s29
      %s32 = sshll.u32 [#allocation5], 4
      %s33 = int_to_ptr.vmem [resolvable:$true] %s32
      %35 = dma.hbm_to_vmem [thread:$0]  %s1, 64, %s33, [#allocation6]
    $region9: #{tpu_custom_call.1} parent=1 // pred_fallthru
      _
    // Predicated region
    $region10: #{tpu_custom_call.1} parent=1 // pred_check
      _
    $region11: #{tpu_custom_call.1} parent=1 // pred_check_branch
      %37 = sbr.rel (0) target = $region13
    $region12: #{tpu_custom_call.1} parent=1 // pred_region
      %s39 = ssub.s32 8192, 8192
      %40 = vsyncadd [#allocation6], %s39
      %s41 = sshll.u32 [#allocation7], 4
      %s42 = int_to_ptr.vmem [resolvable:$true] %s41
      %47 = dma.hbm_to_vmem [thread:$0]  %s2, 8192, %s42, [#allocation6], 128, 128, 8
    $region13: #{tpu_custom_call.1} parent=1 // pred_fallthru
      _
    // Predicated region
    $region14: #{tpu_custom_call.1} parent=1 // pred_check
      _
    $region15: #{tpu_custom_call.1} parent=1 // pred_check_branch
      %49 = sbr.rel (0) target = $region17
    $region16: #{tpu_custom_call.1} parent=1 // pred_region
      %s51 = ssub.s32 8192, 8192
      %52 = vsyncadd [#allocation9], %s51
      %s53 = sshll.u32 [#allocation8], 4
      %s54 = int_to_ptr.vmem [resolvable:$true] %s53
      %59 = dma.hbm_to_vmem [thread:$0]  %s3, 8192, %s54, [#allocation9], 128, 128, 8
    $region17: #{tpu_custom_call.1} parent=1 // pred_fallthru
      _
    // Predicated region
    $region18: #{tpu_custom_call.1} parent=1 // pred_check
      _
    $region19: #{tpu_custom_call.1} parent=1 // pred_check_branch
      %61 = sbr.rel (0) target = $region21
    $region20: #{tpu_custom_call.1} parent=1 // pred_region
      _
    $region21: #{tpu_custom_call.1} parent=1 // pred_fallthru
      _
    // Predicated region
    $region22: #{tpu_custom_call.1} parent=1 // pred_check
      _
    $region23: #{tpu_custom_call.1} parent=1 // pred_check_branch
      %63 = sbr.rel (0) target = $region25
    $region24: #{tpu_custom_call.1} parent=1 // pred_region
      %s65 = ssub.s32 8192, 8192
      %66 = vsyncadd [#allocation9], %s65
      %s67 = sshll.u32 [#allocation10], 4
      %s68 = int_to_ptr.vmem [resolvable:$true] %s67
      %73 = dma.hbm_to_vmem [thread:$0]  %s5, 8192, %s68, [#allocation9], 512, 512, 32
    $region25: #{tpu_custom_call.1} parent=1 // pred_fallthru
      _
    // Predicated region
    $region26: #{tpu_custom_call.1} parent=1 // pred_check
      _
    $region27: #{tpu_custom_call.1} parent=1 // pred_check_branch
      %75 = sbr.rel (0) target = $region29
    $region28: #{tpu_custom_call.1} parent=1 // pred_region
      _
    $region29: #{tpu_custom_call.1} parent=1 // pred_fallthru
      _
    // Predicated region
    $region30: #{tpu_custom_call.1} parent=1 // pred_check
      _
    $region31: #{tpu_custom_call.1} parent=1 // pred_check_branch
      %77 = sbr.rel (0) target = $region33
    $region32: #{tpu_custom_call.1} parent=1 // pred_region
      %78 = dma.done [#allocation3], 64
    $region33: #{tpu_custom_call.1} parent=1 // pred_fallthru
      _
    // Predicated region
    $region34: #{tpu_custom_call.1} parent=1 // pred_check
      _
    $region35: #{tpu_custom_call.1} parent=1 // pred_check_branch
      %80 = sbr.rel (0) target = $region37
    $region36: #{tpu_custom_call.1} parent=1 // pred_region
      %81 = dma.done [#allocation6], 64
    $region37: #{tpu_custom_call.1} parent=1 // pred_fallthru
      _
    // Predicated region
    $region38: #{tpu_custom_call.1} parent=1 // pred_check
      _
    $region39: #{tpu_custom_call.1} parent=1 // pred_check_branch
      %83 = sbr.rel (0) target = $region41
    $region40: #{tpu_custom_call.1} parent=1 // pred_region
      %84 = dma.done [#allocation6], 8192
    $region41: #{tpu_custom_call.1} parent=1 // pred_fallthru
      _
    // Predicated region
    $region42: #{tpu_custom_call.1} parent=1 // pred_check
      _
    $region43: #{tpu_custom_call.1} parent=1 // pred_check_branch
      %86 = sbr.rel (0) target = $region45
    $region44: #{tpu_custom_call.1} parent=1 // pred_region
      %87 = dma.done [#allocation9], 8192
    $region45: #{tpu_custom_call.1} parent=1 // pred_fallthru
      _
    // Predicated region
    $region46: #{tpu_custom_call.1} parent=1 // pred_check
      _
    $region47: #{tpu_custom_call.1} parent=1 // pred_check_branch
      %89 = sbr.rel (0) target = $region49
    $region48: #{tpu_custom_call.1} parent=1 // pred_region
      %90 = dma.done [#allocation9], 8192
    $region49: #{tpu_custom_call.1} parent=1 // pred_fallthru
      _
    %v91 = vld [vmem:[#allocation2] sm:$0xf]
    %v92 = vld [vmem:[#allocation5] sm:$0xf]
    %v93 = vld [vmem:[#allocation7] sm:$0xff]
    %v94 = vld [vmem:[#allocation7 + $0x8] sm:$0xff]
    %v95 = vld [vmem:[#allocation7 + $0x10] sm:$0xff]
    %v96 = vld [vmem:[#allocation7 + $0x18] sm:$0xff]
    %v97 = vld [vmem:[#allocation7 + $0x20] sm:$0xff]
    %v98 = vld [vmem:[#allocation7 + $0x28] sm:$0xff]
    %v99 = vld [vmem:[#allocation7 + $0x30] sm:$0xff]
    %v100 = vld [vmem:[#allocation7 + $0x38] sm:$0xff]
    %v101 = vld [vmem:[#allocation7 + $0x40] sm:$0xff]
    %v102 = vld [vmem:[#allocation7 + $0x48] sm:$0xff]
    %v103 = vld [vmem:[#allocation7 + $0x50] sm:$0xff]
    %v104 = vld [vmem:[#allocation7 + $0x58] sm:$0xff]
    %v105 = vld [vmem:[#allocation7 + $0x60] sm:$0xff]
    %v106 = vld [vmem:[#allocation7 + $0x68] sm:$0xff]
    %v107 = vld [vmem:[#allocation7 + $0x70] sm:$0xff]
    %v108 = vld [vmem:[#allocation7 + $0x78] sm:$0xff]
    %v109 = vld [vmem:[#allocation7 + $0x80] sm:$0xff]
    %v110 = vld [vmem:[#allocation7 + $0x88] sm:$0xff]
    %v111 = vld [vmem:[#allocation7 + $0x90] sm:$0xff]
    %v112 = vld [vmem:[#allocation7 + $0x98] sm:$0xff]
    %v113 = vld [vmem:[#allocation7 + $0xa0] sm:$0xff]
    %v114 = vld [vmem:[#allocation7 + $0xa8] sm:$0xff]
    %v115 = vld [vmem:[#allocation7 + $0xb0] sm:$0xff]
    %v116 = vld [vmem:[#allocation7 + $0xb8] sm:$0xff]
    %v117 = vld [vmem:[#allocation7 + $0xc0] sm:$0xff]
    %v118 = vld [vmem:[#allocation7 + $0xc8] sm:$0xff]
    %v119 = vld [vmem:[#allocation7 + $0xd0] sm:$0xff]
    %v120 = vld [vmem:[#allocation7 + $0xd8] sm:$0xff]
    %v121 = vld [vmem:[#allocation7 + $0xe0] sm:$0xff]
    %v122 = vld [vmem:[#allocation7 + $0xe8] sm:$0xff]
    %v123 = vld [vmem:[#allocation7 + $0xf0] sm:$0xff]
    %v124 = vld [vmem:[#allocation7 + $0xf8] sm:$0xff]
    %v125 = vld [vmem:[#allocation7 + $0x100] sm:$0xff]
    %v126 = vld [vmem:[#allocation7 + $0x108] sm:$0xff]
    %v127 = vld [vmem:[#allocation7 + $0x110] sm:$0xff]
    %v128 = vld [vmem:[#allocation7 + $0x118] sm:$0xff]
    %v129 = vld [vmem:[#allocation7 + $0x120] sm:$0xff]
    %v130 = vld [vmem:[#allocation7 + $0x128] sm:$0xff]
    %v131 = vld [vmem:[#allocation7 + $0x130] sm:$0xff]
    %v132 = vld [vmem:[#allocation7 + $0x138] sm:$0xff]
    %v133 = vld [vmem:[#allocation7 + $0x140] sm:$0xff]
    %v134 = vld [vmem:[#allocation7 + $0x148] sm:$0xff]
    %v135 = vld [vmem:[#allocation7 + $0x150] sm:$0xff]
    %v136 = vld [vmem:[#allocation7 + $0x158] sm:$0xff]
    %v137 = vld [vmem:[#allocation7 + $0x160] sm:$0xff]
    %v138 = vld [vmem:[#allocation7 + $0x168] sm:$0xff]
    %v139 = vld [vmem:[#allocation7 + $0x170] sm:$0xff]
    %v140 = vld [vmem:[#allocation7 + $0x178] sm:$0xff]
    %v141 = vld [vmem:[#allocation7 + $0x180] sm:$0xff]
    %v142 = vld [vmem:[#allocation7 + $0x188] sm:$0xff]
    %v143 = vld [vmem:[#allocation7 + $0x190] sm:$0xff]
    %v144 = vld [vmem:[#allocation7 + $0x198] sm:$0xff]
    %v145 = vld [vmem:[#allocation7 + $0x1a0] sm:$0xff]
    %v146 = vld [vmem:[#allocation7 + $0x1a8] sm:$0xff]
    %v147 = vld [vmem:[#allocation7 + $0x1b0] sm:$0xff]
    %v148 = vld [vmem:[#allocation7 + $0x1b8] sm:$0xff]
    %v149 = vld [vmem:[#allocation7 + $0x1c0] sm:$0xff]
    %v150 = vld [vmem:[#allocation7 + $0x1c8] sm:$0xff]
    %v151 = vld [vmem:[#allocation7 + $0x1d0] sm:$0xff]
    %v152 = vld [vmem:[#allocation7 + $0x1d8] sm:$0xff]
    %v153 = vld [vmem:[#allocation7 + $0x1e0] sm:$0xff]
    %v154 = vld [vmem:[#allocation7 + $0x1e8] sm:$0xff]
    %v155 = vld [vmem:[#allocation7 + $0x1f0] sm:$0xff]
    %v156 = vld [vmem:[#allocation7 + $0x1f8] sm:$0xff]
    %v157 = vld [vmem:[#allocation8] sm:$0xff]
    %v158 = vld [vmem:[#allocation8 + $0x8] sm:$0xff]
    %v159 = vld [vmem:[#allocation8 + $0x10] sm:$0xff]
    %v160 = vld [vmem:[#allocation8 + $0x18] sm:$0xff]
    %v161 = vld [vmem:[#allocation8 + $0x20] sm:$0xff]
    %v162 = vld [vmem:[#allocation8 + $0x28] sm:$0xff]
    %v163 = vld [vmem:[#allocation8 + $0x30] sm:$0xff]
    %v164 = vld [vmem:[#allocation8 + $0x38] sm:$0xff]
    %v165 = vld [vmem:[#allocation8 + $0x40] sm:$0xff]
    %v166 = vld [vmem:[#allocation8 + $0x48] sm:$0xff]
    %v167 = vld [vmem:[#allocation8 + $0x50] sm:$0xff]
    %v168 = vld [vmem:[#allocation8 + $0x58] sm:$0xff]
    %v169 = vld [vmem:[#allocation8 + $0x60] sm:$0xff]
    %v170 = vld [vmem:[#allocation8 + $0x68] sm:$0xff]
    %v171 = vld [vmem:[#allocation8 + $0x70] sm:$0xff]
    %v172 = vld [vmem:[#allocation8 + $0x78] sm:$0xff]
    %v173 = vld [vmem:[#allocation8 + $0x80] sm:$0xff]
    %v174 = vld [vmem:[#allocation8 + $0x88] sm:$0xff]
    %v175 = vld [vmem:[#allocation8 + $0x90] sm:$0xff]
    %v176 = vld [vmem:[#allocation8 + $0x98] sm:$0xff]
    %v177 = vld [vmem:[#allocation8 + $0xa0] sm:$0xff]
    %v178 = vld [vmem:[#allocation8 + $0xa8] sm:$0xff]
    %v179 = vld [vmem:[#allocation8 + $0xb0] sm:$0xff]
    %v180 = vld [vmem:[#allocation8 + $0xb8] sm:$0xff]
    %v181 = vld [vmem:[#allocation8 + $0xc0] sm:$0xff]
    %v182 = vld [vmem:[#allocation8 + $0xc8] sm:$0xff]
    %v183 = vld [vmem:[#allocation8 + $0xd0] sm:$0xff]
    %v184 = vld [vmem:[#allocation8 + $0xd8] sm:$0xff]
    %v185 = vld [vmem:[#allocation8 + $0xe0] sm:$0xff]
    %v186 = vld [vmem:[#allocation8 + $0xe8] sm:$0xff]
    %v187 = vld [vmem:[#allocation8 + $0xf0] sm:$0xff]
    %v188 = vld [vmem:[#allocation8 + $0xf8] sm:$0xff]
    %v189 = vld [vmem:[#allocation8 + $0x100] sm:$0xff]
    %v190 = vld [vmem:[#allocation8 + $0x108] sm:$0xff]
    %v191 = vld [vmem:[#allocation8 + $0x110] sm:$0xff]
    %v192 = vld [vmem:[#allocation8 + $0x118] sm:$0xff]
    %v193 = vld [vmem:[#allocation8 + $0x120] sm:$0xff]
    %v194 = vld [vmem:[#allocation8 + $0x128] sm:$0xff]
    %v195 = vld [vmem:[#allocation8 + $0x130] sm:$0xff]
    %v196 = vld [vmem:[#allocation8 + $0x138] sm:$0xff]
    %v197 = vld [vmem:[#allocation8 + $0x140] sm:$0xff]
    %v198 = vld [vmem:[#allocation8 + $0x148] sm:$0xff]
    %v199 = vld [vmem:[#allocation8 + $0x150] sm:$0xff]
    %v200 = vld [vmem:[#allocation8 + $0x158] sm:$0xff]
    %v201 = vld [vmem:[#allocation8 + $0x160] sm:$0xff]
    %v202 = vld [vmem:[#allocation8 + $0x168] sm:$0xff]
    %v203 = vld [vmem:[#allocation8 + $0x170] sm:$0xff]
    %v204 = vld [vmem:[#allocation8 + $0x178] sm:$0xff]
    %v205 = vld [vmem:[#allocation8 + $0x180] sm:$0xff]
    %v206 = vld [vmem:[#allocation8 + $0x188] sm:$0xff]
    %v207 = vld [vmem:[#allocation8 + $0x190] sm:$0xff]
    %v208 = vld [vmem:[#allocation8 + $0x198] sm:$0xff]
    %v209 = vld [vmem:[#allocation8 + $0x1a0] sm:$0xff]
    %v210 = vld [vmem:[#allocation8 + $0x1a8] sm:$0xff]
    %v211 = vld [vmem:[#allocation8 + $0x1b0] sm:$0xff]
    %v212 = vld [vmem:[#allocation8 + $0x1b8] sm:$0xff]
    %v213 = vld [vmem:[#allocation8 + $0x1c0] sm:$0xff]
    %v214 = vld [vmem:[#allocation8 + $0x1c8] sm:$0xff]
    %v215 = vld [vmem:[#allocation8 + $0x1d0] sm:$0xff]
    %v216 = vld [vmem:[#allocation8 + $0x1d8] sm:$0xff]
    %v217 = vld [vmem:[#allocation8 + $0x1e0] sm:$0xff]
    %v218 = vld [vmem:[#allocation8 + $0x1e8] sm:$0xff]
    %v219 = vld [vmem:[#allocation8 + $0x1f0] sm:$0xff]
    %v220 = vld [vmem:[#allocation8 + $0x1f8] sm:$0xff]
    %v222 = vlaneseq
    %v223 = vshrl.u32 %v222, 7
    %v224 = vsub.s32 0, %v223
    %v225 = vrot.slane %v92, %v224
    %v226 = vlaneseq
    %v227 = vshrl.u32 %v226, 7
    %v228 = vsub.s32 1, %v227
    %v229 = vrot.slane %v92, %v228
    %v230 = vlaneseq
    %v231 = vshrl.u32 %v230, 7
    %v232 = vsub.s32 2, %v231
    %v233 = vrot.slane %v92, %v232
    %v234 = vlaneseq
    %v235 = vshrl.u32 %v234, 7
    %v236 = vsub.s32 3, %v235
    %v237 = vrot.slane %v92, %v236
    %242 = vmatprep.subr.mxu0 0.0
    %243 = vmatpush1.msra.mxu0 %v157
    %244 = vmatprep.subr.mxu0 0.0
    %245 = vmatpush1.msra.mxu0 %v158
    %246 = vmatprep.subr.mxu0 0.0
    %247 = vmatpush1.msra.mxu0 %v159
    %248 = vmatprep.subr.mxu0 0.0
    %249 = vmatpush1.msra.mxu0 %v160
    %250 = vmatprep.subr.mxu0 0.0
    %251 = vmatpush1.msra.mxu0 %v161
    %252 = vmatprep.subr.mxu0 0.0
    %253 = vmatpush1.msra.mxu0 %v162
    %254 = vmatprep.subr.mxu0 0.0
    %255 = vmatpush1.msra.mxu0 %v163
    %256 = vmatprep.subr.mxu0 0.0
    %257 = vmatpush1.msra.mxu0 %v164
    %258 = vmatprep.subr.mxu0 0.0
    %259 = vmatpush1.msra.mxu0 %v165
    %260 = vmatprep.subr.mxu0 0.0
    %261 = vmatpush1.msra.mxu0 %v166
    %262 = vmatprep.subr.mxu0 0.0
    %263 = vmatpush1.msra.mxu0 %v167
    %264 = vmatprep.subr.mxu0 0.0
    %265 = vmatpush1.msra.mxu0 %v168
    %266 = vmatprep.subr.mxu0 0.0
    %267 = vmatpush1.msra.mxu0 %v169
    %268 = vmatprep.subr.mxu0 0.0
    %269 = vmatpush1.msra.mxu0 %v170
    %270 = vmatprep.subr.mxu0 0.0
    %271 = vmatpush1.msra.mxu0 %v171
    %272 = vmatprep.subr.mxu0 0.0
    %273 = vmatpush1.msra.mxu0 %v172
    %274 = vmatprep.subr.mxu0 0.0
    %275 = vmatpush1.msra.mxu0 %v173
    %276 = vmatprep.subr.mxu0 0.0
    %277 = vmatpush1.msra.mxu0 %v174
    %278 = vmatprep.subr.mxu0 0.0
    %279 = vmatpush1.msra.mxu0 %v175
    %280 = vmatprep.subr.mxu0 0.0
    %281 = vmatpush1.msra.mxu0 %v176
    %282 = vmatprep.subr.mxu0 0.0
    %283 = vmatpush1.msra.mxu0 %v177
    %284 = vmatprep.subr.mxu0 0.0
    %285 = vmatpush1.msra.mxu0 %v178
    %286 = vmatprep.subr.mxu0 0.0
    %287 = vmatpush1.msra.mxu0 %v179
    %288 = vmatprep.subr.mxu0 0.0
    %289 = vmatpush1.msra.mxu0 %v180
    %290 = vmatprep.subr.mxu0 0.0
    %291 = vmatpush1.msra.mxu0 %v181
    %292 = vmatprep.subr.mxu0 0.0
    %293 = vmatpush1.msra.mxu0 %v182
    %294 = vmatprep.subr.mxu0 0.0
    %295 = vmatpush1.msra.mxu0 %v183
    %296 = vmatprep.subr.mxu0 0.0
    %297 = vmatpush1.msra.mxu0 %v184
    %298 = vmatprep.subr.mxu0 0.0
    %299 = vmatpush1.msra.mxu0 %v185
    %300 = vmatprep.subr.mxu0 0.0
    %301 = vmatpush1.msra.mxu0 %v186
    %302 = vmatprep.subr.mxu0 0.0
    %303 = vmatpush1.msra.mxu0 %v187
    %304 = vmatprep.subr.mxu0 0.0
    %305 = vmatpush1.msra.mxu0 %v188
    %306 = vmatprep.mubr.f32.mxu0 %v229
    %307 = vmatmul.mubr.f32.gmra.mrb[0].mxu0 %v225
    %v308 = vpop.f32.mrb[0].mxu0
    %v309 = vadd.f32 0.0, %v308
    %v310 = vpop.f32.mrb[0].mxu0
    %311 = vdwg.mxu0
    %312 = vmatprep.subr.mxu0 0.0
    %313 = vmatpush1.msra.mxu0 %v189
    %314 = vmatprep.subr.mxu0 0.0
    %315 = vmatpush1.msra.mxu0 %v190
    %316 = vmatprep.subr.mxu0 0.0
    %317 = vmatpush1.msra.mxu0 %v191
    %318 = vmatprep.subr.mxu0 0.0
    %319 = vmatpush1.msra.mxu0 %v192
    %320 = vmatprep.subr.mxu0 0.0
    %321 = vmatpush1.msra.mxu0 %v193
    %322 = vmatprep.subr.mxu0 0.0
    %323 = vmatpush1.msra.mxu0 %v194
    %324 = vmatprep.subr.mxu0 0.0
    %325 = vmatpush1.msra.mxu0 %v195
    %326 = vmatprep.subr.mxu0 0.0
    %327 = vmatpush1.msra.mxu0 %v196
    %328 = vmatprep.subr.mxu0 0.0
    %329 = vmatpush1.msra.mxu0 %v197
    %330 = vmatprep.subr.mxu0 0.0
    %331 = vmatpush1.msra.mxu0 %v198
    %332 = vmatprep.subr.mxu0 0.0
    %333 = vmatpush1.msra.mxu0 %v199
    %334 = vmatprep.subr.mxu0 0.0
    %335 = vmatpush1.msra.mxu0 %v200
    %336 = vmatprep.subr.mxu0 0.0
    %337 = vmatpush1.msra.mxu0 %v201
    %338 = vmatprep.subr.mxu0 0.0
    %339 = vmatpush1.msra.mxu0 %v202
    %340 = vmatprep.subr.mxu0 0.0
    %341 = vmatpush1.msra.mxu0 %v203
    %342 = vmatprep.subr.mxu0 0.0
    %343 = vmatpush1.msra.mxu0 %v204
    %344 = vmatprep.subr.mxu0 0.0
    %345 = vmatpush1.msra.mxu0 %v205
    %346 = vmatprep.subr.mxu0 0.0
    %347 = vmatpush1.msra.mxu0 %v206
    %348 = vmatprep.subr.mxu0 0.0
    %349 = vmatpush1.msra.mxu0 %v207
    %350 = vmatprep.subr.mxu0 0.0
    %351 = vmatpush1.msra.mxu0 %v208
    %352 = vmatprep.subr.mxu0 0.0
    %353 = vmatpush1.msra.mxu0 %v209
    %354 = vmatprep.subr.mxu0 0.0
    %355 = vmatpush1.msra.mxu0 %v210
    %356 = vmatprep.subr.mxu0 0.0
    %357 = vmatpush1.msra.mxu0 %v211
    %358 = vmatprep.subr.mxu0 0.0
    %359 = vmatpush1.msra.mxu0 %v212
    %360 = vmatprep.subr.mxu0 0.0
    %361 = vmatpush1.msra.mxu0 %v213
    %362 = vmatprep.subr.mxu0 0.0
    %363 = vmatpush1.msra.mxu0 %v214
    %364 = vmatprep.subr.mxu0 0.0
    %365 = vmatpush1.msra.mxu0 %v215
    %366 = vmatprep.subr.mxu0 0.0
    %367 = vmatpush1.msra.mxu0 %v216
    %368 = vmatprep.subr.mxu0 0.0
    %369 = vmatpush1.msra.mxu0 %v217
    %370 = vmatprep.subr.mxu0 0.0
    %371 = vmatpush1.msra.mxu0 %v218
    %372 = vmatprep.subr.mxu0 0.0
    %373 = vmatpush1.msra.mxu0 %v219
    %374 = vmatprep.subr.mxu0 0.0
    %375 = vmatpush1.msra.mxu0 %v220
    %376 = vmatprep.mubr.f32.mxu0 %v237
    %377 = vmatmul.mubr.f32.gmra.mrb[0].mxu0 %v233
    %v378 = vpop.f32.mrb[0].mxu0
    %v379 = vadd.f32 %v309, %v378
    %v380 = vpop.f32.mrb[0].mxu0
    %381 = vdwg.mxu0
    %v383 = vlaneseq
    %v384 = vshrl.u32 %v383, 7
    %v385 = vsub.s32 0, %v384
    %v386 = vrot.slane %v91, %v385
    %v387 = vlaneseq
    %v388 = vshrl.u32 %v387, 7
    %v389 = vsub.s32 1, %v388
    %v390 = vrot.slane %v91, %v389
    %v391 = vlaneseq
    %v392 = vshrl.u32 %v391, 7
    %v393 = vsub.s32 2, %v392
    %v394 = vrot.slane %v91, %v393
    %v395 = vlaneseq
    %v396 = vshrl.u32 %v395, 7
    %v397 = vsub.s32 3, %v396
    %v398 = vrot.slane %v91, %v397
    %403 = vmatprep.subr.mxu0 0.0
    %404 = vmatpush1.msra.mxu0 %v93
    %405 = vmatprep.subr.mxu0 0.0
    %406 = vmatpush1.msra.mxu0 %v94
    %407 = vmatprep.subr.mxu0 0.0
    %408 = vmatpush1.msra.mxu0 %v95
    %409 = vmatprep.subr.mxu0 0.0
    %410 = vmatpush1.msra.mxu0 %v96
    %411 = vmatprep.subr.mxu0 0.0
    %412 = vmatpush1.msra.mxu0 %v97
    %413 = vmatprep.subr.mxu0 0.0
    %414 = vmatpush1.msra.mxu0 %v98
    %415 = vmatprep.subr.mxu0 0.0
    %416 = vmatpush1.msra.mxu0 %v99
    %417 = vmatprep.subr.mxu0 0.0
    %418 = vmatpush1.msra.mxu0 %v100
    %419 = vmatprep.subr.mxu0 0.0
    %420 = vmatpush1.msra.mxu0 %v101
    %421 = vmatprep.subr.mxu0 0.0
    %422 = vmatpush1.msra.mxu0 %v102
    %423 = vmatprep.subr.mxu0 0.0
    %424 = vmatpush1.msra.mxu0 %v103
    %425 = vmatprep.subr.mxu0 0.0
    %426 = vmatpush1.msra.mxu0 %v104
    %427 = vmatprep.subr.mxu0 0.0
    %428 = vmatpush1.msra.mxu0 %v105
    %429 = vmatprep.subr.mxu0 0.0
    %430 = vmatpush1.msra.mxu0 %v106
    %431 = vmatprep.subr.mxu0 0.0
    %432 = vmatpush1.msra.mxu0 %v107
    %433 = vmatprep.subr.mxu0 0.0
    %434 = vmatpush1.msra.mxu0 %v108
    %435 = vmatprep.subr.mxu0 0.0
    %436 = vmatpush1.msra.mxu0 %v109
    %437 = vmatprep.subr.mxu0 0.0
    %438 = vmatpush1.msra.mxu0 %v110
    %439 = vmatprep.subr.mxu0 0.0
    %440 = vmatpush1.msra.mxu0 %v111
    %441 = vmatprep.subr.mxu0 0.0
    %442 = vmatpush1.msra.mxu0 %v112
    %443 = vmatprep.subr.mxu0 0.0
    %444 = vmatpush1.msra.mxu0 %v113
    %445 = vmatprep.subr.mxu0 0.0
    %446 = vmatpush1.msra.mxu0 %v114
    %447 = vmatprep.subr.mxu0 0.0
    %448 = vmatpush1.msra.mxu0 %v115
    %449 = vmatprep.subr.mxu0 0.0
    %450 = vmatpush1.msra.mxu0 %v116
    %451 = vmatprep.subr.mxu0 0.0
    %452 = vmatpush1.msra.mxu0 %v117
    %453 = vmatprep.subr.mxu0 0.0
    %454 = vmatpush1.msra.mxu0 %v118
    %455 = vmatprep.subr.mxu0 0.0
    %456 = vmatpush1.msra.mxu0 %v119
    %457 = vmatprep.subr.mxu0 0.0
    %458 = vmatpush1.msra.mxu0 %v120
    %459 = vmatprep.subr.mxu0 0.0
    %460 = vmatpush1.msra.mxu0 %v121
    %461 = vmatprep.subr.mxu0 0.0
    %462 = vmatpush1.msra.mxu0 %v122
    %463 = vmatprep.subr.mxu0 0.0
    %464 = vmatpush1.msra.mxu0 %v123
    %465 = vmatprep.subr.mxu0 0.0
    %466 = vmatpush1.msra.mxu0 %v124
    %467 = vmatprep.mubr.f32.mxu0 %v390
    %468 = vmatmul.mubr.f32.gmra.mrb[0].mxu0 %v386
    %v469 = vpop.f32.mrb[0].mxu0
    %v470 = vadd.f32 %v379, %v469
    %v471 = vpop.f32.mrb[0].mxu0
    %472 = vdwg.mxu0
    %473 = vmatprep.subr.mxu0 0.0
    %474 = vmatpush1.msra.mxu0 %v125
    %475 = vmatprep.subr.mxu0 0.0
    %476 = vmatpush1.msra.mxu0 %v126
    %477 = vmatprep.subr.mxu0 0.0
    %478 = vmatpush1.msra.mxu0 %v127
    %479 = vmatprep.subr.mxu0 0.0
    %480 = vmatpush1.msra.mxu0 %v128
    %481 = vmatprep.subr.mxu0 0.0
    %482 = vmatpush1.msra.mxu0 %v129
    %483 = vmatprep.subr.mxu0 0.0
    %484 = vmatpush1.msra.mxu0 %v130
    %485 = vmatprep.subr.mxu0 0.0
    %486 = vmatpush1.msra.mxu0 %v131
    %487 = vmatprep.subr.mxu0 0.0
    %488 = vmatpush1.msra.mxu0 %v132
    %489 = vmatprep.subr.mxu0 0.0
    %490 = vmatpush1.msra.mxu0 %v133
    %491 = vmatprep.subr.mxu0 0.0
    %492 = vmatpush1.msra.mxu0 %v134
    %493 = vmatprep.subr.mxu0 0.0
    %494 = vmatpush1.msra.mxu0 %v135
    %495 = vmatprep.subr.mxu0 0.0
    %496 = vmatpush1.msra.mxu0 %v136
    %497 = vmatprep.subr.mxu0 0.0
    %498 = vmatpush1.msra.mxu0 %v137
    %499 = vmatprep.subr.mxu0 0.0
    %500 = vmatpush1.msra.mxu0 %v138
    %501 = vmatprep.subr.mxu0 0.0
    %502 = vmatpush1.msra.mxu0 %v139
    %503 = vmatprep.subr.mxu0 0.0
    %504 = vmatpush1.msra.mxu0 %v140
    %505 = vmatprep.subr.mxu0 0.0
    %506 = vmatpush1.msra.mxu0 %v141
    %507 = vmatprep.subr.mxu0 0.0
    %508 = vmatpush1.msra.mxu0 %v142
    %509 = vmatprep.subr.mxu0 0.0
    %510 = vmatpush1.msra.mxu0 %v143
    %511 = vmatprep.subr.mxu0 0.0
    %512 = vmatpush1.msra.mxu0 %v144
    %513 = vmatprep.subr.mxu0 0.0
    %514 = vmatpush1.msra.mxu0 %v145
    %515 = vmatprep.subr.mxu0 0.0
    %516 = vmatpush1.msra.mxu0 %v146
    %517 = vmatprep.subr.mxu0 0.0
    %518 = vmatpush1.msra.mxu0 %v147
    %519 = vmatprep.subr.mxu0 0.0
    %520 = vmatpush1.msra.mxu0 %v148
    %521 = vmatprep.subr.mxu0 0.0
    %522 = vmatpush1.msra.mxu0 %v149
    %523 = vmatprep.subr.mxu0 0.0
    %524 = vmatpush1.msra.mxu0 %v150
    %525 = vmatprep.subr.mxu0 0.0
    %526 = vmatpush1.msra.mxu0 %v151
    %527 = vmatprep.subr.mxu0 0.0
    %528 = vmatpush1.msra.mxu0 %v152
    %529 = vmatprep.subr.mxu0 0.0
    %530 = vmatpush1.msra.mxu0 %v153
    %531 = vmatprep.subr.mxu0 0.0
    %532 = vmatpush1.msra.mxu0 %v154
    %533 = vmatprep.subr.mxu0 0.0
    %534 = vmatpush1.msra.mxu0 %v155
    %535 = vmatprep.subr.mxu0 0.0
    %536 = vmatpush1.msra.mxu0 %v156
    %537 = vmatprep.mubr.f32.mxu0 %v398
    %538 = vmatmul.mubr.f32.gmra.mrb[0].mxu0 %v394
    %v539 = vpop.f32.mrb[0].mxu0
    %v540 = vadd.f32 %v470, %v539
    %v541 = vpop.f32.mrb[0].mxu0
    %542 = vdwg.mxu0
    %v543 = vld [vmem:[%s4] sm:$0x1]
    %v544 = vadd.f32 %v540, %v543
    %v545 = vmax.f32 %v544, 0.0
    %v546 = vld [vmem:[#allocation10] sm:$0xff]
    %v547 = vld [vmem:[#allocation10 + $0x8] sm:$0xff]
    %v548 = vld [vmem:[#allocation10 + $0x10] sm:$0xff]
    %v549 = vld [vmem:[#allocation10 + $0x18] sm:$0xff]
    %v550 = vld [vmem:[#allocation10 + $0x20] sm:$0xff]
    %v551 = vld [vmem:[#allocation10 + $0x28] sm:$0xff]
    %v552 = vld [vmem:[#allocation10 + $0x30] sm:$0xff]
    %v553 = vld [vmem:[#allocation10 + $0x38] sm:$0xff]
    %v554 = vld [vmem:[#allocation10 + $0x40] sm:$0xff]
    %v555 = vld [vmem:[#allocation10 + $0x48] sm:$0xff]
    %v556 = vld [vmem:[#allocation10 + $0x50] sm:$0xff]
    %v557 = vld [vmem:[#allocation10 + $0x58] sm:$0xff]
    %v558 = vld [vmem:[#allocation10 + $0x60] sm:$0xff]
    %v559 = vld [vmem:[#allocation10 + $0x68] sm:$0xff]
    %v560 = vld [vmem:[#allocation10 + $0x70] sm:$0xff]
    %v561 = vld [vmem:[#allocation10 + $0x78] sm:$0xff]
    %v562 = vld [vmem:[#allocation10 + $0x80] sm:$0xff]
    %v563 = vld [vmem:[#allocation10 + $0x88] sm:$0xff]
    %v564 = vld [vmem:[#allocation10 + $0x90] sm:$0xff]
    %v565 = vld [vmem:[#allocation10 + $0x98] sm:$0xff]
    %v566 = vld [vmem:[#allocation10 + $0xa0] sm:$0xff]
    %v567 = vld [vmem:[#allocation10 + $0xa8] sm:$0xff]
    %v568 = vld [vmem:[#allocation10 + $0xb0] sm:$0xff]
    %v569 = vld [vmem:[#allocation10 + $0xb8] sm:$0xff]
    %v570 = vld [vmem:[#allocation10 + $0xc0] sm:$0xff]
    %v571 = vld [vmem:[#allocation10 + $0xc8] sm:$0xff]
    %v572 = vld [vmem:[#allocation10 + $0xd0] sm:$0xff]
    %v573 = vld [vmem:[#allocation10 + $0xd8] sm:$0xff]
    %v574 = vld [vmem:[#allocation10 + $0xe0] sm:$0xff]
    %v575 = vld [vmem:[#allocation10 + $0xe8] sm:$0xff]
    %v576 = vld [vmem:[#allocation10 + $0xf0] sm:$0xff]
    %v577 = vld [vmem:[#allocation10 + $0xf8] sm:$0xff]
    %v578 = vld [vmem:[#allocation10 + $0x100] sm:$0xff]
    %v579 = vld [vmem:[#allocation10 + $0x108] sm:$0xff]
    %v580 = vld [vmem:[#allocation10 + $0x110] sm:$0xff]
    %v581 = vld [vmem:[#allocation10 + $0x118] sm:$0xff]
    %v582 = vld [vmem:[#allocation10 + $0x120] sm:$0xff]
    %v583 = vld [vmem:[#allocation10 + $0x128] sm:$0xff]
    %v584 = vld [vmem:[#allocation10 + $0x130] sm:$0xff]
    %v585 = vld [vmem:[#allocation10 + $0x138] sm:$0xff]
    %v586 = vld [vmem:[#allocation10 + $0x140] sm:$0xff]
    %v587 = vld [vmem:[#allocation10 + $0x148] sm:$0xff]
    %v588 = vld [vmem:[#allocation10 + $0x150] sm:$0xff]
    %v589 = vld [vmem:[#allocation10 + $0x158] sm:$0xff]
    %v590 = vld [vmem:[#allocation10 + $0x160] sm:$0xff]
    %v591 = vld [vmem:[#allocation10 + $0x168] sm:$0xff]
    %v592 = vld [vmem:[#allocation10 + $0x170] sm:$0xff]
    %v593 = vld [vmem:[#allocation10 + $0x178] sm:$0xff]
    %v594 = vld [vmem:[#allocation10 + $0x180] sm:$0xff]
    %v595 = vld [vmem:[#allocation10 + $0x188] sm:$0xff]
    %v596 = vld [vmem:[#allocation10 + $0x190] sm:$0xff]
    %v597 = vld [vmem:[#allocation10 + $0x198] sm:$0xff]
    %v598 = vld [vmem:[#allocation10 + $0x1a0] sm:$0xff]
    %v599 = vld [vmem:[#allocation10 + $0x1a8] sm:$0xff]
    %v600 = vld [vmem:[#allocation10 + $0x1b0] sm:$0xff]
    %v601 = vld [vmem:[#allocation10 + $0x1b8] sm:$0xff]
    %v602 = vld [vmem:[#allocation10 + $0x1c0] sm:$0xff]
    %v603 = vld [vmem:[#allocation10 + $0x1c8] sm:$0xff]
    %v604 = vld [vmem:[#allocation10 + $0x1d0] sm:$0xff]
    %v605 = vld [vmem:[#allocation10 + $0x1d8] sm:$0xff]
    %v606 = vld [vmem:[#allocation10 + $0x1e0] sm:$0xff]
    %v607 = vld [vmem:[#allocation10 + $0x1e8] sm:$0xff]
    %v608 = vld [vmem:[#allocation10 + $0x1f0] sm:$0xff]
    %v609 = vld [vmem:[#allocation10 + $0x1f8] sm:$0xff]
    %v610 = vld [vmem:[%s6] sm:$0xf]
    %v612 = vlaneseq
    %v613 = vshrl.u32 %v612, 7
    %v614 = vsub.s32 0, %v613
    %v615 = vrot.slane %v610, %v614
    %v616 = vlaneseq
    %v617 = vshrl.u32 %v616, 7
    %v618 = vsub.s32 1, %v617
    %v619 = vrot.slane %v610, %v618
    %v620 = vlaneseq
    %v621 = vshrl.u32 %v620, 7
    %v622 = vsub.s32 2, %v621
    %v623 = vrot.slane %v610, %v622
    %v624 = vlaneseq
    %v625 = vshrl.u32 %v624, 7
    %v626 = vsub.s32 3, %v625
    %v627 = vrot.slane %v610, %v626
    %632 = vmatprep.subr.mxu0 %v547
    %633 = vmatpush1.msra.mxu0 %v546
    %634 = vmatprep.subr.mxu0 %v551
    %635 = vmatpush1.msra.mxu0 %v550
    %636 = vmatprep.subr.mxu0 %v555
    %637 = vmatpush1.msra.mxu0 %v554
    %638 = vmatprep.subr.mxu0 %v559
    %639 = vmatpush1.msra.mxu0 %v558
    %640 = vmatprep.subr.mxu0 %v563
    %641 = vmatpush1.msra.mxu0 %v562
    %642 = vmatprep.subr.mxu0 %v567
    %643 = vmatpush1.msra.mxu0 %v566
    %644 = vmatprep.subr.mxu0 %v571
    %645 = vmatpush1.msra.mxu0 %v570
    %646 = vmatprep.subr.mxu0 %v575
    %647 = vmatpush1.msra.mxu0 %v574
    %648 = vmatprep.subr.mxu0 %v579
    %649 = vmatpush1.msra.mxu0 %v578
    %650 = vmatprep.subr.mxu0 %v583
    %651 = vmatpush1.msra.mxu0 %v582
    %652 = vmatprep.subr.mxu0 %v587
    %653 = vmatpush1.msra.mxu0 %v586
    %654 = vmatprep.subr.mxu0 %v591
    %655 = vmatpush1.msra.mxu0 %v590
    %656 = vmatprep.subr.mxu0 %v595
    %657 = vmatpush1.msra.mxu0 %v594
    %658 = vmatprep.subr.mxu0 %v599
    %659 = vmatpush1.msra.mxu0 %v598
    %660 = vmatprep.subr.mxu0 %v603
    %661 = vmatpush1.msra.mxu0 %v602
    %662 = vmatprep.subr.mxu0 %v607
    %663 = vmatpush1.msra.mxu0 %v606
    %664 = vmatprep.subr.mxu0 0.0
    %665 = vmatpush1.msra.mxu0 0.0
    %666 = vmatprep.subr.mxu0 0.0
    %667 = vmatpush1.msra.mxu0 0.0
    %668 = vmatprep.subr.mxu0 0.0
    %669 = vmatpush1.msra.mxu0 0.0
    %670 = vmatprep.subr.mxu0 0.0
    %671 = vmatpush1.msra.mxu0 0.0
    %672 = vmatprep.subr.mxu0 0.0
    %673 = vmatpush1.msra.mxu0 0.0
    %674 = vmatprep.subr.mxu0 0.0
    %675 = vmatpush1.msra.mxu0 0.0
    %676 = vmatprep.subr.mxu0 0.0
    %677 = vmatpush1.msra.mxu0 0.0
    %678 = vmatprep.subr.mxu0 0.0
    %679 = vmatpush1.msra.mxu0 0.0
    %680 = vmatprep.subr.mxu0 0.0
    %681 = vmatpush1.msra.mxu0 0.0
    %682 = vmatprep.subr.mxu0 0.0
    %683 = vmatpush1.msra.mxu0 0.0
    %684 = vmatprep.subr.mxu0 0.0
    %685 = vmatpush1.msra.mxu0 0.0
    %686 = vmatprep.subr.mxu0 0.0
    %687 = vmatpush1.msra.mxu0 0.0
    %688 = vmatprep.subr.mxu0 0.0
    %689 = vmatpush1.msra.mxu0 0.0
    %690 = vmatprep.subr.mxu0 0.0
    %691 = vmatpush1.msra.mxu0 0.0
    %692 = vmatprep.subr.mxu0 0.0
    %693 = vmatpush1.msra.mxu0 0.0
    %694 = vmatprep.subr.mxu0 0.0
    %695 = vmatpush1.msra.mxu0 0.0
    %696 = vmatprep.mubr.f32.mxu0 0.0
    %697 = vmatmul.mubr.f32.gmra.mrb[0].mxu0 %v545
    %v698 = vpop.f32.mrb[0].mxu0
    %v699 = vadd.f32 %v615, %v698
    %v700 = vpop.f32.mrb[0].mxu0
    %v701 = vadd.f32 %v619, %v700
    %702 = vdwg.mxu0
    %703 = vmatprep.subr.mxu0 %v549
    %704 = vmatpush1.msra.mxu0 %v548
    %705 = vmatprep.subr.mxu0 %v553
    %706 = vmatpush1.msra.mxu0 %v552
    %707 = vmatprep.subr.mxu0 %v557
    %708 = vmatpush1.msra.mxu0 %v556
    %709 = vmatprep.subr.mxu0 %v561
    %710 = vmatpush1.msra.mxu0 %v560
    %711 = vmatprep.subr.mxu0 %v565
    %712 = vmatpush1.msra.mxu0 %v564
    %713 = vmatprep.subr.mxu0 %v569
    %714 = vmatpush1.msra.mxu0 %v568
    %715 = vmatprep.subr.mxu0 %v573
    %716 = vmatpush1.msra.mxu0 %v572
    %717 = vmatprep.subr.mxu0 %v577
    %718 = vmatpush1.msra.mxu0 %v576
    %719 = vmatprep.subr.mxu0 %v581
    %720 = vmatpush1.msra.mxu0 %v580
    %721 = vmatprep.subr.mxu0 %v585
    %722 = vmatpush1.msra.mxu0 %v584
    %723 = vmatprep.subr.mxu0 %v589
    %724 = vmatpush1.msra.mxu0 %v588
    %725 = vmatprep.subr.mxu0 %v593
    %726 = vmatpush1.msra.mxu0 %v592
    %727 = vmatprep.subr.mxu0 %v597
    %728 = vmatpush1.msra.mxu0 %v596
    %729 = vmatprep.subr.mxu0 %v601
    %730 = vmatpush1.msra.mxu0 %v600
    %731 = vmatprep.subr.mxu0 %v605
    %732 = vmatpush1.msra.mxu0 %v604
    %733 = vmatprep.subr.mxu0 %v609
    %734 = vmatpush1.msra.mxu0 %v608
    %735 = vmatprep.subr.mxu0 0.0
    %736 = vmatpush1.msra.mxu0 0.0
    %737 = vmatprep.subr.mxu0 0.0
    %738 = vmatpush1.msra.mxu0 0.0
    %739 = vmatprep.subr.mxu0 0.0
    %740 = vmatpush1.msra.mxu0 0.0
    %741 = vmatprep.subr.mxu0 0.0
    %742 = vmatpush1.msra.mxu0 0.0
    %743 = vmatprep.subr.mxu0 0.0
    %744 = vmatpush1.msra.mxu0 0.0
    %745 = vmatprep.subr.mxu0 0.0
    %746 = vmatpush1.msra.mxu0 0.0
    %747 = vmatprep.subr.mxu0 0.0
    %748 = vmatpush1.msra.mxu0 0.0
    %749 = vmatprep.subr.mxu0 0.0
    %750 = vmatpush1.msra.mxu0 0.0
    %751 = vmatprep.subr.mxu0 0.0
    %752 = vmatpush1.msra.mxu0 0.0
    %753 = vmatprep.subr.mxu0 0.0
    %754 = vmatpush1.msra.mxu0 0.0
    %755 = vmatprep.subr.mxu0 0.0
    %756 = vmatpush1.msra.mxu0 0.0
    %757 = vmatprep.subr.mxu0 0.0
    %758 = vmatpush1.msra.mxu0 0.0
    %759 = vmatprep.subr.mxu0 0.0
    %760 = vmatpush1.msra.mxu0 0.0
    %761 = vmatprep.subr.mxu0 0.0
    %762 = vmatpush1.msra.mxu0 0.0
    %763 = vmatprep.subr.mxu0 0.0
    %764 = vmatpush1.msra.mxu0 0.0
    %765 = vmatprep.subr.mxu0 0.0
    %766 = vmatpush1.msra.mxu0 0.0
    %767 = vmatprep.mubr.f32.mxu0 0.0
    %768 = vmatmul.mubr.f32.gmra.mrb[0].mxu0 %v545
    %v769 = vpop.f32.mrb[0].mxu0
    %v770 = vadd.f32 %v623, %v769
    %v771 = vpop.f32.mrb[0].mxu0
    %v772 = vadd.f32 %v627, %v771
    %773 = vdwg.mxu0
    %v774 = vxor.u32 %v699, 2147483648
    %v775 = vxor.u32 %v701, 2147483648
    %v776 = vxor.u32 %v770, 2147483648
    %v777 = vxor.u32 %v772, 2147483648
    %v778 = vmul.f32 %v774, 1.442695
    %v779 = vpow.pop %v778
    %v780 = vmul.f32 %v775, 1.442695
    %v781 = vpow.pop %v780
    %v782 = vmul.f32 %v776, 1.442695
    %v783 = vpow.pop %v782
    %v784 = vmul.f32 %v777, 1.442695
    %v785 = vpow.pop %v784
    %v786 = vadd.f32 %v779, 1.0
    %v787 = vadd.f32 %v781, 1.0
    %v788 = vadd.f32 %v783, 1.0
    %v789 = vadd.f32 %v785, 1.0
    %v790 = vrcp.pop %v786
    %v791 = vmul.f32 1.0, %v790
    %v792 = vrcp.pop %v787
    %v793 = vmul.f32 1.0, %v792
    %v794 = vrcp.pop %v788
    %v795 = vmul.f32 1.0, %v794
    %v796 = vrcp.pop %v789
    %v797 = vmul.f32 1.0, %v796
    %v802 = vcombine.low %v791, %v793
    %v803 = vcombine.low %v795, %v797
    %v805 = vunpack.c.l.s4 1966171168
    %v806 = vunpack.c.0.s8 %v805
    %v807 = vlaneseq
    %v808 = vshrl.u32 %v807, 7
    %v809 = vsub.s32 %v806, %v808
    %v810 = vrot.slane %v802, %v809
    %v812 = vunpack.c.l.s4 1966171168
    %v813 = vunpack.c.0.s8 %v812
    %v814 = vlaneseq
    %v815 = vshrl.u32 %v814, 7
    %v816 = vsub.s32 %v813, %v815
    %v817 = vrot.slane %v803, %v816
    %v818 = vcombine.low %v810, %v817
    %v820 = vunpack.c.l.s4 1966171168
    %v821 = vunpack.c.0.s8 %v820
    %v822 = vlaneseq
    %v823 = vshrl.u32 %v822, 7
    %v824 = vsub.s32 %v821, %v823
    %v825 = vrot.slane %v818, %v824
    %v827 = vmul.f32 %v91, %v825
    %v828 = vlaneseq
    %vm829 = vcmp.ge.s32.totalorder %v828, 0
    %vm830 = vcmp.lt.s32.totalorder %v828, 512
    %vm831 = vmand %vm829, %vm830
    %832 = vst.msk [vmem:[#allocation11] sm:$0xf] %vm831, %v827
    // Predicated region
    $region50: #{tpu_custom_call.1} parent=1 // pred_check
      _
    $region51: #{tpu_custom_call.1} parent=1 // pred_check_branch
      %834 = sbr.rel (0) target = $region53
    $region52: #{tpu_custom_call.1} parent=1 // pred_region
      %s836 = ssub.s32 64, 64
      %837 = vsyncadd [#allocation4], %s836
      %s839 = sshll.u32 [#allocation11], 4
      %s840 = int_to_ptr.vmem [resolvable:$true] %s839
      %842 = dma.vmem_to_hbm [thread:$0]  %s840, 64, %s7, [#allocation4]
    $region53: #{tpu_custom_call.1} parent=1 // pred_fallthru
      _
    // Predicated region
    $region54: #{tpu_custom_call.1} parent=1 // pred_check
      _
    $region55: #{tpu_custom_call.1} parent=1 // pred_check_branch
      %844 = sbr.rel (0) target = $region57
    $region56: #{tpu_custom_call.1} parent=1 // pred_region
      %845 = dma.done [#allocation4], 64
    $region57: #{tpu_custom_call.1} parent=1 // pred_fallthru
      _
    %846 = vsyncpa [#allocation3], 1
    %847 = vsyncpa [#allocation6], 1
    %848 = vsyncpa [#allocation9], 1
    %849 = vsyncpa [#allocation4], 1

</llo_original>
